<compile_context>
chip_gen: v5e
topology: v5e:2x2
jax: 0.10.0
libtpu: 0.0.40
codegen_flags: <defaults>
</compile_context>

<pallas_src>
import jax
import jax.numpy as jnp
from jax.experimental import pallas as pl
from jax.experimental.pallas import tpu as pltpu


def _round_up(x, m):
    return ((x + m - 1) // m) * m


def _sin_time_emb_kernel(t_ref, w_ref, out_ref):
    # t_ref:   (TB, K_AUG) f32  packed timesteps | ones column | zero padding
    # w_ref:   (K_AUG, L)  f32  masked freq rows | phase row   | zero padding
    # out_ref: (TB, L)
    # MXU does the broadcast-multiply + phase add; VPU only runs the sin poly.
    emb = jnp.dot(t_ref[...], w_ref[...],
                  preferred_element_type=jnp.float32,
                  precision=jax.lax.Precision.HIGHEST)
    out_ref[...] = jnp.sin(emb).astype(out_ref.dtype)


def sinusoidal_time_embedding(t, dim, *, out_dtype=jnp.float32, row_tile=8192):
    """t: (B,) timesteps -> (B, dim) [sin | cos] sinusoidal embedding."""
    assert dim % 2 == 0 and dim >= 2, "dim must be even and >= 2"
    B = t.shape[0]
    half = dim // 2

    # ---- lane-dense output width ------------------------------------------
    if dim < 128 and 128 % dim == 0:
        k = 128 // dim                     # batch rows packed per 128-lane row
        lane_w = 128                       # == k * dim, no column padding
    else:
        k = 1
        lane_w = _round_up(dim, 128)       # zero-freq padded columns, sliced off
    k_aug = max(8, _round_up(k + 1, 8))    # contracting dim: freqs + phase (+pad)

    # ---- constants, hoisted out of the kernel -------------------------------
    scale = -(jnp.log(jnp.float32(10000.0)) / jnp.float32(half))
    j = jnp.arange(dim)
    freq_row = jnp.exp((j % half).astype(jnp.float32) * scale)             # (dim,)
    phase_row = jnp.where(j >= half, jnp.float32(jnp.pi / 2.0),
                          jnp.float32(0.0))                                # (dim,)
    if k > 1:                                      # lane_w == k * dim
        seg = jnp.arange(lane_w) // dim
        w = jnp.where(seg[None, :] == jnp.arange(k)[:, None],
                      jnp.tile(freq_row, k)[None, :], jnp.float32(0.0))    # (k, L)
        phase_full = jnp.tile(phase_row, k)                                # (L,)
    else:
        pad = lane_w - dim
        w = jnp.pad(freq_row, (0, pad))[None, :]                           # (1, L)
        phase_full = jnp.pad(phase_row, (0, pad))                          # (L,)
    w_aug = jnp.concatenate(
        [w.astype(jnp.float32),
         phase_full[None, :].astype(jnp.float32),
         jnp.zeros((k_aug - k - 1, lane_w), jnp.float32)], axis=0)         # (k_aug, L)

    # ---- row tiling ----------------------------------------------------------
    out_itemsize = jnp.dtype(out_dtype).itemsize
    row_tile = max(8, (int(row_tile) // 8) * 8)          # validate caller value
    vmem_budget = 12 * 1024 * 1024                       # double-buffered out cap
    row_tile = min(row_tile,
                   max(8, (vmem_budget // (2 * lane_w * out_itemsize)) // 8 * 8))

    bp_needed = pl.cdiv(B, k)                 # packed rows actually required
    min_rows_for_split = 1024                 # below this, one grid step is cheapest
    if bp_needed < min_rows_for_split and bp_needed <= row_tile:
        n_steps = 1
    else:
        # >= 2 steps so v7x can shard the parallel axis across both TensorCores.
        n_steps = max(2, pl.cdiv(bp_needed, row_tile))
    tb = _round_up(pl.cdiv(bp_needed, n_steps), 8)       # <= row_tile, mult of 8
    bp = n_steps * tb                                    # < 8 wasted rows / step
    b_pad = bp * k

    t_f32 = t.astype(jnp.float32).reshape(B)
    if b_pad != B:
        t_f32 = jnp.pad(t_f32, (0, b_pad - B))
    t_packed = t_f32.reshape(bp, k)
    t_aug = jnp.concatenate(
        [t_packed, jnp.ones((bp, 1), jnp.float32),
         jnp.zeros((bp, k_aug - k - 1), jnp.float32)], axis=1)             # (bp, k_aug)

    cost = pl.CostEstimate(
        flops=2 * bp * lane_w * k_aug,
        transcendentals=bp * lane_w,
        bytes_accessed=bp * k_aug * 4 + k_aug * lane_w * 4
                       + bp * lane_w * out_itemsize,
    )

    out_packed = pl.pallas_call(
        _sin_time_emb_kernel,
        out_shape=jax.ShapeDtypeStruct((bp, lane_w), out_dtype),
        grid=(n_steps,),
        in_specs=[
            pl.BlockSpec((tb, k_aug), lambda i: (i, 0)),      # packed timesteps
            pl.BlockSpec((k_aug, lane_w), lambda i: (0, 0)),  # freqs+phase, resident
        ],
        out_specs=pl.BlockSpec((tb, lane_w), lambda i: (i, 0)),
        compiler_params=pltpu.CompilerParams(dimension_semantics=("parallel",)),
        cost_estimate=cost,
    )(t_aug, w_aug)

    if k > 1:
        # Row-major view back to (B, dim) (free), drop padding rows.
        return out_packed.reshape(bp * k, dim)[:B]
    return out_packed[:B, :dim]


def _reference(t, dim):
    half = dim // 2
    freq = jnp.exp(jnp.arange(half, dtype=jnp.float32)
                   * -(jnp.log(jnp.float32(10000.0)) / half))
    emb = t.astype(jnp.float32)[:, None] * freq[None, :]
    return jnp.concatenate([jnp.sin(emb), jnp.cos(emb)], axis=-1)


if __name__ == "__main__":
    key = jax.random.PRNGKey(0)

    # Typical diffusion-timestep use: tiny batch, small dim (packed k=4 path).
    B, dim = 8, 32
    t = jax.random.uniform(key, (B,), dtype=jnp.float32, minval=0.0, maxval=1000.0)
    out = jax.block_until_ready(sinusoidal_time_embedding(t, dim))
    ref = _reference(t, dim)
    assert out.shape == (B, dim) and out.dtype == jnp.float32
    # cos == sin(x + pi/2) and the argument goes through the MXU's multi-pass
    # f32 decomposition -> allow a few 1e-4 absolute slack at arguments ~1e3.
    assert jnp.allclose(out, ref, atol=5e-4, rtol=1e-5), "mismatch (packed path)"

    # Multi-step grid + row padding (bp_needed = 1250 -> 2 parallel steps).
    B2 = 5000
    t2 = jax.random.uniform(jax.random.PRNGKey(1), (B2,), dtype=jnp.float32,
                            minval=0.0, maxval=1000.0)
    out2 = jax.block_until_ready(sinusoidal_time_embedding(t2, dim))
    assert out2.shape == (B2, dim)
    assert jnp.allclose(out2, _reference(t2, dim), atol=5e-4, rtol=1e-5), "mismatch (grid)"

    # Unpacked path, dim a multiple of 128 (k = 1, no column padding).
    B3, dim3 = 16, 256
    t3 = jax.random.uniform(jax.random.PRNGKey(2), (B3,), dtype=jnp.float32,
                            minval=0.0, maxval=1000.0)
    out3 = jax.block_until_ready(sinusoidal_time_embedding(t3, dim3))
    assert out3.shape == (B3, dim3)
    assert jnp.allclose(out3, _reference(t3, dim3), atol=5e-4, rtol=1e-5), "mismatch (wide)"

    # Awkward dim (not a divisor/multiple of 128): lane-padded to 128, sliced back.
    B4, dim4 = 12, 40
    t4 = jax.random.uniform(jax.random.PRNGKey(3), (B4,), dtype=jnp.float32,
                            minval=0.0, maxval=1000.0)
    out4 = jax.block_until_ready(sinusoidal_time_embedding(t4, dim4))
    assert out4.shape == (B4, dim4)
    assert jnp.allclose(out4, _reference(t4, dim4), atol=5e-4, rtol=1e-5), "mismatch (padded)"

    print("KERNEL_OK")
</pallas_src>

<mosaic_0001>
module attributes {stable_mosaic.version = 11 : i64} {
  func.func @_sin_time_emb_kernel(%arg0: i32, %arg1: memref<8x8xf32, #tpu.memory_space<vmem>>, %arg2: memref<8x128xf32, #tpu.memory_space<vmem>>, %arg3: memref<8x128xf32, #tpu.memory_space<vmem>>) attributes {dimension_semantics = [#tpu.dimension_semantics<parallel>], iteration_bounds = array<i64: 1>, scalar_prefetch = 0 : i64, scratch_operands = 0 : i64, tpu.core_type = #tpu.core_type<tc>, window_params = [{transform_indices = @transform_0, window_bounds = array<i64: 8, 8>}, {pipeline_mode = #tpu.pipeline_mode<synchronous>, transform_indices = @transform_1, window_bounds = array<i64: 8, 128>}, {transform_indices = @transform_2, window_bounds = array<i64: 8, 128>}]} {
    %c0 = arith.constant 0 : index
    %c0_0 = arith.constant 0 : index
    %0 = vector.load %arg1[%c0, %c0_0] : memref<8x8xf32, #tpu.memory_space<vmem>>, vector<8x8xf32>
    %c0_1 = arith.constant 0 : index
    %c0_2 = arith.constant 0 : index
    %1 = vector.load %arg2[%c0_1, %c0_2] : memref<8x128xf32, #tpu.memory_space<vmem>>, vector<8x128xf32>
    %cst = arith.constant dense<0.000000e+00> : vector<8x128xf32>
    %2 = tpu.matmul %0, %1, %cst {dimension_numbers = #tpu.dot_dimension_numbers<[1], [0], [0], [1], [0, 0, 1, 1], [], []>, precision = #tpu.contract_precision<fp32>} : vector<8x8xf32>, vector<8x128xf32>, vector<8x128xf32> -> vector<8x128xf32>
    %3 = math.sin %2 : vector<8x128xf32>
    %c0_3 = arith.constant 0 : index
    %c0_4 = arith.constant 0 : index
    %4 = vector.load %arg3[%c0_3, %c0_4] : memref<8x128xf32, #tpu.memory_space<vmem>>, vector<8x128xf32>
    tpu.vector_store %arg3[%c0_3, %c0_4], %3 {strides = array<i32>} : memref<8x128xf32, #tpu.memory_space<vmem>>, vector<8x128xf32>,
    return
  }
  func.func @transform_0(%arg0: i32) -> (i32, i32) {
    %c0_i32 = arith.constant 0 : i32
    %c0_i32_0 = arith.constant 0 : i32
    return %arg0, %c0_i32 : i32, i32
  }
  func.func @transform_1(%arg0: i32) -> (i32, i32) {
    %c0_i32 = arith.constant 0 : i32
    %c0_i32_0 = arith.constant 0 : i32
    %c0_i32_1 = arith.constant 0 : i32
    return %c0_i32, %c0_i32_0 : i32, i32
  }
  func.func @transform_2(%arg0: i32) -> (i32, i32) {
    %c0_i32 = arith.constant 0 : i32
    %c0_i32_0 = arith.constant 0 : i32
    return %arg0, %c0_i32 : i32, i32
  }
}

</mosaic_0001>

<llo_original>
// kernel: tpu_custom_call.1
$region0: #{tpu_custom_call.1}
  #allocation0 [shape = 'u32[]', space=smem, size = 0x4, offset = 0x4, fixed_abs, tag = 'smem constant byte address 0x4 - core index']
  #allocation1 [shape = 'u32[72,128]{1,0:T(1,128)}', space=vmem, size = 0x9000, scoped, tag = 'internal scratch']
  %s0 = inlined_call_operand.hbm [shape: f32[8,8], index: 0, kind: input, shape index: {}]
  %s1 = inlined_call_operand.hbm [shape: f32[8,128], index: 1, kind: input, shape index: {}]
  %s2 = inlined_call_operand.hbm [shape: f32[8,128], index: 2, kind: output, shape index: {}]
  %s3 = sld [smem:[#allocation0]]
  $region26: #{tpu_custom_call.1} parent=0
    _
  %s5 = ssub.s32 1, %s3
  %s6 = scalar_select 0, %s5, %s3
  $region1: #{tpu_custom_call.1} parent=0
    #allocation2 [shape = 'u8[4096]{0}', space=vmem, size = 0x1000, scoped, tag = 'input window, operand 0, single buffered']
    #allocation3 [shape = 's32[1]{0}', space=sflag, size = 0x4, scoped, tag = 'scoped memory for tpu_custom_call.1']
    #allocation4 [shape = 's32[1]{0}', space=sflag, size = 0x4, scoped, tag = 'scoped memory for tpu_custom_call.1']
    #allocation5 [shape = 'u8[4096]{0}', space=vmem, size = 0x1000, scoped, tag = 'input window, operand 1, single buffered']
    #allocation6 [shape = 's32[1]{0}', space=sflag, size = 0x4, scoped, tag = 'scoped memory for tpu_custom_call.1']
    #allocation7 [shape = 'u8[4096]{0}', space=vmem, size = 0x1000, scoped, tag = 'output window, operand 0, single buffered']
    %7 = vsyncpa [#allocation3], 0
    %8 = vsyncpa [#allocation6], 0
    %9 = vsyncpa [#allocation4], 0
    // Predicated region
    $region2: #{tpu_custom_call.1} parent=1 // pred_check
      _
    $region3: #{tpu_custom_call.1} parent=1 // pred_check_branch
      %11 = sbr.rel (0) target = $region5
    $region4: #{tpu_custom_call.1} parent=1 // pred_region
      %13 = vsyncadd [#allocation3], 0
      %s15 = sshll.u32 %s0, 4
      %s16 = int_to_ptr.hbm [resolvable:$true] %s15
      %s17 = sshll.u32 [#allocation2], 4
      %s18 = int_to_ptr.vmem [resolvable:$true] %s17
      %20 = dma.hbm_to_vmem [thread:$0]  %s16, 128, %s18, [#allocation3]
    $region5: #{tpu_custom_call.1} parent=1 // pred_fallthru
      _
    // Predicated region
    $region6: #{tpu_custom_call.1} parent=1 // pred_check
      _
    $region7: #{tpu_custom_call.1} parent=1 // pred_check_branch
      %22 = sbr.rel (0) target = $region9
    $region8: #{tpu_custom_call.1} parent=1 // pred_region
      %24 = vsyncadd [#allocation6], 0
      %s26 = sshll.u32 %s1, 4
      %s27 = int_to_ptr.hbm [resolvable:$true] %s26
      %s28 = sshll.u32 [#allocation5], 4
      %s29 = int_to_ptr.vmem [resolvable:$true] %s28
      %31 = dma.hbm_to_vmem [thread:$0]  %s27, 128, %s29, [#allocation6]
    $region9: #{tpu_custom_call.1} parent=1 // pred_fallthru
      _
    // Predicated region
    $region10: #{tpu_custom_call.1} parent=1 // pred_check
      _
    $region11: #{tpu_custom_call.1} parent=1 // pred_check_branch
      %33 = sbr.rel (0) target = $region13
    $region12: #{tpu_custom_call.1} parent=1 // pred_region
      %35 = dma.done [#allocation3], 128
    $region13: #{tpu_custom_call.1} parent=1 // pred_fallthru
      _
    // Predicated region
    $region14: #{tpu_custom_call.1} parent=1 // pred_check
      _
    $region15: #{tpu_custom_call.1} parent=1 // pred_check_branch
      %37 = sbr.rel (0) target = $region17
    $region16: #{tpu_custom_call.1} parent=1 // pred_region
      %39 = dma.done [#allocation6], 128
    $region17: #{tpu_custom_call.1} parent=1 // pred_fallthru
      _
    %v40 = vld [vmem:[#allocation2] sm:$0xff]
    %v41 = vld [vmem:[#allocation5] sm:$0xff]
    %vm42 = vcmask 64512
    %v44 = vsel %vm42, %v40, 0
    %46 = vmatpush.msra.mxu0 0.0
    %47 = vmatpush.msra.mxu0 0.0
    %48 = vmatpush.msra.mxu0 0.0
    %49 = vmatpush.msra.mxu0 0.0
    %50 = vmatpush.msra.mxu0 0.0
    %51 = vmatpush.msra.mxu0 0.0
    %52 = vmatpush.msra.mxu0 0.0
    %53 = vmatpush.msra.mxu0 0.0
    %54 = vmatpush.msra.mxu0 0.0
    %55 = vmatpush.msra.mxu0 0.0
    %56 = vmatpush.msra.mxu0 0.0
    %57 = vmatpush.msra.mxu0 0.0
    %58 = vmatpush.msra.mxu0 0.0
    %59 = vmatpush.msra.mxu0 0.0
    %60 = vmatpush.msra.mxu0 0.0
    %v61 = vand.u32 %v41, 4294901760
    %62 = vmatpush.msra.mxu0 %v61
    %v63 = vand.u32 %v44, 4294901760
    %v64 = vsub.f32 %v44, %v63
    %v65 = vand.u32 %v64, 4294901760
    %v66 = vsub.f32 %v64, %v65
    %v67 = vand.u32 %v66, 4294901760
    %68 = vmatmul.f32.gmra.mxu0 %v67
    %v69 = vpop.f32.mrf.mxu0
    %v70 = vadd.f32 0.0, %v69
    %71 = vdwg.mxu0
    %72 = vmatpush.msra.mxu0 0.0
    %73 = vmatpush.msra.mxu0 0.0
    %74 = vmatpush.msra.mxu0 0.0
    %75 = vmatpush.msra.mxu0 0.0
    %76 = vmatpush.msra.mxu0 0.0
    %77 = vmatpush.msra.mxu0 0.0
    %78 = vmatpush.msra.mxu0 0.0
    %79 = vmatpush.msra.mxu0 0.0
    %80 = vmatpush.msra.mxu0 0.0
    %81 = vmatpush.msra.mxu0 0.0
    %82 = vmatpush.msra.mxu0 0.0
    %83 = vmatpush.msra.mxu0 0.0
    %84 = vmatpush.msra.mxu0 0.0
    %85 = vmatpush.msra.mxu0 0.0
    %86 = vmatpush.msra.mxu0 0.0
    %v87 = vand.u32 %v41, 4294901760
    %v88 = vsub.f32 %v41, %v87
    %v89 = vand.u32 %v88, 4294901760
    %v90 = vsub.f32 %v88, %v89
    %v91 = vand.u32 %v90, 4294901760
    %92 = vmatpush.msra.mxu0 %v91
    %v93 = vand.u32 %v44, 4294901760
    %94 = vmatmul.f32.gmra.mxu0 %v93
    %v95 = vpop.f32.mrf.mxu0
    %v96 = vadd.f32 %v70, %v95
    %97 = vdwg.mxu0
    %98 = vmatpush.msra.mxu0 0.0
    %99 = vmatpush.msra.mxu0 0.0
    %100 = vmatpush.msra.mxu0 0.0
    %101 = vmatpush.msra.mxu0 0.0
    %102 = vmatpush.msra.mxu0 0.0
    %103 = vmatpush.msra.mxu0 0.0
    %104 = vmatpush.msra.mxu0 0.0
    %105 = vmatpush.msra.mxu0 0.0
    %106 = vmatpush.msra.mxu0 0.0
    %107 = vmatpush.msra.mxu0 0.0
    %108 = vmatpush.msra.mxu0 0.0
    %109 = vmatpush.msra.mxu0 0.0
    %110 = vmatpush.msra.mxu0 0.0
    %111 = vmatpush.msra.mxu0 0.0
    %112 = vmatpush.msra.mxu0 0.0
    %v113 = vand.u32 %v41, 4294901760
    %v114 = vsub.f32 %v41, %v113
    %115 = vmatpush.msra.mxu0 %v114
    %v116 = vand.u32 %v44, 4294901760
    %v117 = vsub.f32 %v44, %v116
    %118 = vmatmul.f32.gmra.mxu0 %v117
    %v119 = vpop.f32.mrf.mxu0
    %v120 = vadd.f32 %v96, %v119
    %121 = vdwg.mxu0
    %122 = vmatpush.msra.mxu0 0.0
    %123 = vmatpush.msra.mxu0 0.0
    %124 = vmatpush.msra.mxu0 0.0
    %125 = vmatpush.msra.mxu0 0.0
    %126 = vmatpush.msra.mxu0 0.0
    %127 = vmatpush.msra.mxu0 0.0
    %128 = vmatpush.msra.mxu0 0.0
    %129 = vmatpush.msra.mxu0 0.0
    %130 = vmatpush.msra.mxu0 0.0
    %131 = vmatpush.msra.mxu0 0.0
    %132 = vmatpush.msra.mxu0 0.0
    %133 = vmatpush.msra.mxu0 0.0
    %134 = vmatpush.msra.mxu0 0.0
    %135 = vmatpush.msra.mxu0 0.0
    %136 = vmatpush.msra.mxu0 0.0
    %v137 = vand.u32 %v41, 4294901760
    %138 = vmatpush.msra.mxu0 %v137
    %v139 = vand.u32 %v44, 4294901760
    %v140 = vsub.f32 %v44, %v139
    %v141 = vand.u32 %v140, 4294901760
    %142 = vmatmul.f32.gmra.mxu0 %v141
    %v143 = vpop.f32.mrf.mxu0
    %v144 = vadd.f32 %v120, %v143
    %145 = vdwg.mxu0
    %146 = vmatpush.msra.mxu0 0.0
    %147 = vmatpush.msra.mxu0 0.0
    %148 = vmatpush.msra.mxu0 0.0
    %149 = vmatpush.msra.mxu0 0.0
    %150 = vmatpush.msra.mxu0 0.0
    %151 = vmatpush.msra.mxu0 0.0
    %152 = vmatpush.msra.mxu0 0.0
    %153 = vmatpush.msra.mxu0 0.0
    %154 = vmatpush.msra.mxu0 0.0
    %155 = vmatpush.msra.mxu0 0.0
    %156 = vmatpush.msra.mxu0 0.0
    %157 = vmatpush.msra.mxu0 0.0
    %158 = vmatpush.msra.mxu0 0.0
    %159 = vmatpush.msra.mxu0 0.0
    %160 = vmatpush.msra.mxu0 0.0
    %v161 = vand.u32 %v41, 4294901760
    %v162 = vsub.f32 %v41, %v161
    %v163 = vand.u32 %v162, 4294901760
    %164 = vmatpush.msra.mxu0 %v163
    %v165 = vand.u32 %v44, 4294901760
    %166 = vmatmul.f32.gmra.mxu0 %v165
    %v167 = vpop.f32.mrf.mxu0
    %v168 = vadd.f32 %v144, %v167
    %169 = vdwg.mxu0
    %170 = vmatpush.msra.mxu0 0.0
    %171 = vmatpush.msra.mxu0 0.0
    %172 = vmatpush.msra.mxu0 0.0
    %173 = vmatpush.msra.mxu0 0.0
    %174 = vmatpush.msra.mxu0 0.0
    %175 = vmatpush.msra.mxu0 0.0
    %176 = vmatpush.msra.mxu0 0.0
    %177 = vmatpush.msra.mxu0 0.0
    %178 = vmatpush.msra.mxu0 0.0
    %179 = vmatpush.msra.mxu0 0.0
    %180 = vmatpush.msra.mxu0 0.0
    %181 = vmatpush.msra.mxu0 0.0
    %182 = vmatpush.msra.mxu0 0.0
    %183 = vmatpush.msra.mxu0 0.0
    %184 = vmatpush.msra.mxu0 0.0
    %v185 = vand.u32 %v41, 4294901760
    %186 = vmatpush.msra.mxu0 %v185
    %v187 = vand.u32 %v44, 4294901760
    %188 = vmatmul.f32.gmra.mxu0 %v187
    %v189 = vpop.f32.mrf.mxu0
    %v190 = vadd.f32 %v168, %v189
    %191 = vdwg.mxu0
    %v192 = vand.u32 2147483647, %v190
    %vm193 = vcmp.le.f32.partialorder %v192, 0.7853982
    %vm194 = vcmp.lt.s32.totalorder %v190, 0
    %v195 = vand.u32 %v190, 2139095040
    %v196 = vshrl.u32 %v195, 23
    %v197 = vsub.s32 %v196, 127
    %v198 = vand.u32 2147483647, %v190
    %v199 = vand.u32 %v198, 8388607
    %v200 = vor.u32 %v199, 8388608
    %v201 = vsub.s32 0, %v200
    %v202 = vadd.s32 %v197, 1
    %vm203 = vcmp.gt.s32.totalorder %v202, 0
    %v204 = vsel %vm203, %v202, 0
    %v205 = vshrl.u32 %v204, 5
    %v206 = vand.u32 %v204, 31
    %v207 = vsub.s32 32, %v206
    %v208 = vshrl.u32 683565275, %v207
    %v209 = vshll.u32 683565275, %v206
    %v210 = vshrl.u32 2475754826, %v207
    %v211 = vor.u32 %v209, %v210
    %v212 = vshll.u32 2475754826, %v206
    %v213 = vshrl.u32 2131351028, %v207
    %v214 = vor.u32 %v212, %v213
    %v215 = vshll.u32 2131351028, %v206
    %v216 = vshrl.u32 2102212464, %v207
    %v217 = vor.u32 %v215, %v216
    %v218 = vshll.u32 2102212464, %v206
    %v219 = vshrl.u32 920167782, %v207
    %v220 = vor.u32 %v218, %v219
    %v221 = vshll.u32 920167782, %v206
    %v222 = vshrl.u32 1326507024, %v207
    %v223 = vor.u32 %v221, %v222
    %vm224 = vcmp.lt.s32.totalorder %v205, 1
    %vm225 = vcmp.lt.s32.totalorder %v205, 2
    %vm226 = vcmp.lt.s32.totalorder %v205, 3
    %vm227 = vcmp.lt.s32.totalorder %v205, 4
    %v228 = vsel %vm224, %v208, %v211
    %v229 = vsel %vm227, %v217, 2102212464
    %v230 = vsel %vm226, %v214, %v229
    %v231 = vsel %vm225, %v228, %v230
    %v232 = vsel %vm224, %v211, %v214
    %v233 = vsel %vm227, %v220, 920167782
    %v234 = vsel %vm226, %v217, %v233
    %v235 = vsel %vm225, %v232, %v234
    %v236 = vsel %vm224, %v214, %v217
    %v237 = vsel %vm227, %v223, 1326507024
    %v238 = vsel %vm226, %v220, %v237
    %v239 = vsel %vm225, %v236, %v238
    %v240 = vshll.u32 %v200, 8
    %v241 = vand.u32 %v240, 65535
    %v242 = vshrl.u32 %v240, 16
    %v243 = vand.u32 %v239, 65535
    %v244 = vshrl.u32 %v239, 16
    %v245 = vmul.u32 %v241, %v243
    %v246 = vmul.u32 %v241, %v244
    %v247 = vmul.u32 %v242, %v243
    %v248 = vmul.u32 %v242, %v244
    %v249 = vshll.u32 %v246, 16
    %v250 = vshrl.u32 %v246, 16
    %v251 = vshll.u32 %v247, 16
    %v252 = vshrl.u32 %v247, 16
    %vm253 = vc.u32 %v245, %v249
    %v254 = vsel %vm253, 1, 0
    %v255 = vadd.s32 %v245, %v249
    %v256 = vadd.s32 %v248, %v254
    %vm257 = vc.u32 %v255, %v251
    %v258 = vsel %vm257, 1, 0
    %v259 = vadd.s32 %v255, %v251
    %v260 = vadd.s32 %v256, %v258
    %v261 = vadd.s32 %v260, %v250
    %v262 = vadd.s32 %v261, %v252
    %v263 = vand.u32 %v240, 65535
    %v264 = vshrl.u32 %v240, 16
    %v265 = vand.u32 %v235, 65535
    %v266 = vshrl.u32 %v235, 16
    %v267 = vmul.u32 %v263, %v265
    %v268 = vmul.u32 %v263, %v266
    %v269 = vmul.u32 %v264, %v265
    %v270 = vmul.u32 %v264, %v266
    %v271 = vshll.u32 %v268, 16
    %v272 = vshrl.u32 %v268, 16
    %v273 = vshll.u32 %v269, 16
    %v274 = vshrl.u32 %v269, 16
    %vm275 = vc.u32 %v267, %v271
    %v276 = vsel %vm275, 1, 0
    %v277 = vadd.s32 %v267, %v271
    %v278 = vadd.s32 %v270, %v276
    %vm279 = vc.u32 %v277, %v273
    %v280 = vsel %vm279, 1, 0
    %v281 = vadd.s32 %v277, %v273
    %v282 = vadd.s32 %v278, %v280
    %v283 = vadd.s32 %v282, %v272
    %v284 = vadd.s32 %v283, %v274
    %v285 = vmul.u32 %v240, %v231
    %v286 = vadd.s32 %v262, %v281
    %vm287 = vc.u32 %v262, %v281
    %v288 = vadd.s32 %v284, 1
    %v289 = vsel %vm287, %v288, %v284
    %v290 = vadd.s32 %v285, %v289
    %v291 = vadd.s32 %v290, 536870912
    %v292 = vshrl.u32 %v291, 30
    %v293 = vshll.u32 %v292, 30
    %v294 = vsub.s32 %v290, %v293
    %vm295 = vcmp.lt.s32.totalorder %v294, 0
    %v296 = vsub.s32 0, %v294
    %v297 = vsel %vm295, %v296, %v294
    %v298 = vclz %v297
    %v299 = vsub.s32 %v298, 2
    %vm300 = vcmp.gt.s32.totalorder 0, %v299
    %v301 = vsel %vm300, 0, %v299
    %v302 = vsub.s32 32, %v301
    %v303 = vshll.u32 %v294, %v301
    %v304 = vshrl.u32 %v286, %v302
    %v305 = vor.u32 %v303, %v304
    %v306 = vsub.s32 4294967266, %v301
    %v307 = vadd.s32 %v306, 127
    %v308 = vshll.u32 %v307, 23
    %v309 = vor.u32 4788187, %v308
    %v310 = vand.u32 2147483647, %v309
    %v312 = vcvt.s32.f32 %v305
    %v313 = vmul.f32 %v312, %v310
    %v314 = vxor.u32 %v313, 2147483648
    %v315 = vsel %vm194, %v314, %v313
    %v316 = vsub.s32 4, %v292
    %v317 = vsel %vm194, %v316, %v292
    %v318 = vsel %vm193, %v190, %v315
    %v319 = vsel %vm193, 0, %v317
    %v320 = vmul.f32 %v318, %v318
    %v321 = vmul.f32 %v320, -0.001358992
    %v322 = vadd.f32 %v321, 0.041655596
    %v323 = vmul.f32 %v320, %v322
    %v324 = vadd.f32 %v323, -0.4999988
    %v325 = vmul.f32 %v320, %v324
    %v326 = vadd.f32 1.0, %v325
    %v327 = vmul.f32 %v318, %v318
    %v328 = vmul.f32 %v327, -0.00019511016
    %v329 = vadd.f32 %v328, 0.008332121
    %v330 = vmul.f32 %v327, %v329
    %v331 = vadd.f32 %v330, -0.16666654
    %v332 = vmul.f32 %v327, %v331
    %v333 = vadd.f32 %v332, 1.0
    %v334 = vmul.f32 %v333, %v318
    %vm335 = vweird.f32 %v190
    %v336 = vadd.s32 %v319, 3
    %v337 = vand.u32 %v336, 3
    %vm338 = vcmp.lt.s32.totalorder %v337, 2
    %vm339 = vcmp.eq.s32.totalorder %v337, 0
    %v340 = vxor.u32 %v334, 2147483648
    %v341 = vsel %vm339, %v326, %v340
    %vm342 = vcmp.eq.s32.totalorder %v337, 2
    %v343 = vxor.u32 %v326, 2147483648
    %v344 = vsel %vm342, %v343, %v334
    %v345 = vsel %vm338, %v341, %v344
    %v346 = vsel %vm335, nan, %v345
    %347 = vst [vmem:[#allocation7] sm:$0xff] %v346
    // Predicated region
    $region18: #{tpu_custom_call.1} parent=1 // pred_check
      _
    $region19: #{tpu_custom_call.1} parent=1 // pred_check_branch
      %349 = sbr.rel (0) target = $region21
    $region20: #{tpu_custom_call.1} parent=1 // pred_region
      %351 = vsyncadd [#allocation4], 0
      %s353 = sshll.u32 [#allocation7], 4
      %s354 = int_to_ptr.vmem [resolvable:$true] %s353
      %s355 = sshll.u32 %s2, 4
      %s356 = int_to_ptr.hbm [resolvable:$true] %s355
      %358 = dma.vmem_to_hbm [thread:$0]  %s354, 128, %s356, [#allocation4]
    $region21: #{tpu_custom_call.1} parent=1 // pred_fallthru
      _
    // Predicated region
    $region22: #{tpu_custom_call.1} parent=1 // pred_check
      _
    $region23: #{tpu_custom_call.1} parent=1 // pred_check_branch
      %360 = sbr.rel (0) target = $region25
    $region24: #{tpu_custom_call.1} parent=1 // pred_region
      %362 = dma.done [#allocation4], 128
    $region25: #{tpu_custom_call.1} parent=1 // pred_fallthru
      _
    %363 = vsyncpa [#allocation3], 1
    %364 = vsyncpa [#allocation6], 1
    %365 = vsyncpa [#allocation4], 1

</llo_original>
